<compile_context>
chip_gen: v5e
topology: v5e:2x2
jax: 0.10.0
libtpu: 0.0.40
codegen_flags: <defaults>
</compile_context>

<pallas_src>
import jax
import jax.numpy as jnp
from jax import lax
from jax.experimental import pallas as pl
from jax.experimental.pallas import tpu as pltpu


def _round_up(x: int, m: int) -> int:
    return ((x + m - 1) // m) * m


def _cdiv(a: int, b: int) -> int:
    return -(-a // b)


_MAX_TB = 256  # cap on batch rows per block (bounds out/acc VMEM padding waste)


def _make_kernel(M: int, tm: int, nm: int, nm_pp: int,
                 ragged_m: bool, has_oob: bool):
    """Build the reduction kernel with shape constants baked in via closure."""

    def kernel(x_ref, o_ref, acc_ref):
        # x_ref:   (tb, tm, N)   input tile (tm rows of the M axis, full N)
        # o_ref:   (1, tb, 1, 1) per-partition partial sums for tb batch rows
        # acc_ref: (tb, 1, 1)    f32 accumulator, persistent across k steps
        p = pl.program_id(0)           # reduction partition (TensorCore split)
        k = pl.program_id(2)           # reduction step within this partition
        g = p * nm_pp + k              # global M-block index

        @pl.when(k == 0)
        def _init():
            acc_ref[...] = jnp.zeros_like(acc_ref)

        def add_tile(masked: bool):
            x = x_ref[...]
            if x.dtype != jnp.float32:
                x = x.astype(jnp.float32)
            if masked:
                # Ragged M tail: zero rows past the end of the array.
                rem = M - g * tm
                rows = lax.broadcasted_iota(jnp.int32, (1, tm, 1), 1)
                x = jnp.where(rows < rem, x, 0.0)
            # Fold the sublane (tm) axis first: the bulk of the work is plain
            # elementwise vreg adds on the VPU.  The cross-lane reduce below
            # only touches a (tb, 1, N) remainder once per grid step.
            col = jnp.sum(x, axis=1, keepdims=True)              # (tb, 1, N)
            acc_ref[...] += jnp.sum(col, axis=2, keepdims=True)  # (tb, 1, 1)

        if ragged_m:
            @pl.when(g < nm - 1)
            def _body():
                add_tile(False)

            @pl.when(g == nm - 1)
            def _tail():
                add_tile(True)
        elif has_oob:
            # Odd block count split across 2 partitions: skip the padded step.
            @pl.when(g < nm)
            def _body():
                add_tile(False)
        else:
            add_tile(False)

        @pl.when(k == pl.num_programs(2) - 1)
        def _finalize():
            o_ref[0] = acc_ref[...].astype(o_ref.dtype)

    return kernel


def reduce_sum_dims_1_2_keepdim(a: jax.Array) -> jax.Array:
    """Equivalent of torch.sum(a, (1, 2), keepdim=True) for a 3-D array."""
    B, M, N = a.shape
    if B == 0 or M == 0 or N == 0:
        return jnp.zeros((B, 1, 1), dtype=a.dtype)

    item = a.dtype.itemsize
    n_pad = _round_up(N, 128)

    # ---- generation-aware VMEM budget -----------------------------------
    try:
        vmem_cap = int(pltpu.get_tpu_info().vmem_capacity_bytes)
    except Exception:  # pragma: no cover - conservative fallback
        vmem_cap = 64 * 1024 * 1024
    if vmem_cap <= 64 * 1024 * 1024:          # v7x-class (64 MiB per core)
        target_tile = 12 * 1024 * 1024
    else:                                     # v5e/v6e (128 MiB)
        target_tile = 16 * 1024 * 1024
    vmem_cap_limit = min(100 * 1024 * 1024,
                         max(32 * 1024 * 1024, vmem_cap - 8 * 1024 * 1024))

    # ---- choose the (tb, tm, N) block ------------------------------------
    if M <= 8:
        tm = M                                 # full dim (allowed even if < 8)
    else:
        rows = max(8, (target_tile // (n_pad * item)) // 8 * 8)
        tm = M if rows >= M else rows          # multiple of 8, or full M
    nm = _cdiv(M, tm)
    tm_pad = _round_up(tm, 8)
    slab_bytes = tm_pad * n_pad * item         # one batch row's share of a tile

    if nm == 1:
        tb = int(min(B, _MAX_TB, max(1, target_tile // slab_bytes)))
    else:
        tb = 1                                 # big rows: one row per block
    nb = _cdiv(B, tb)

    # Split the reduction axis across both TensorCores (v7x) when the batch
    # axis alone cannot keep two cores busy; harmless on single-core chips.
    P = 2 if (nb == 1 and nm >= 2) else 1
    nm_pp = _cdiv(nm, P)
    has_oob = (P * nm_pp != nm)
    ragged_m = (nm * tm != M)

    tile_bytes = tb * slab_bytes
    # double-buffered input + (tiny) output/accumulator buffers + slack
    vmem_need = 2 * tile_bytes + 3 * tb * 8 * 128 * 4 + 4 * 1024 * 1024
    vmem_limit = int(min(vmem_cap_limit, max(32 * 1024 * 1024, vmem_need)))
    # TODO(synk): extremely wide rows (8 * N * 4 bytes > VMEM budget, i.e.
    # N >~ 400K with M >= 8) would additionally need lane-axis tiling.

    kernel = _make_kernel(M, tm, nm, nm_pp, ragged_m, has_oob)

    parts = pl.pallas_call(
        kernel,
        out_shape=jax.ShapeDtypeStruct((P, B, 1, 1), a.dtype),
        grid_spec=pltpu.PrefetchScalarGridSpec(
            num_scalar_prefetch=0,
            grid=(P, nb, nm_pp),
            in_specs=[pl.BlockSpec(
                (tb, tm, N),
                lambda p, b, k: (b, jnp.minimum(p * nm_pp + k, nm - 1), 0))],
            out_specs=pl.BlockSpec(
                (1, tb, 1, 1), lambda p, b, k: (p, b, 0, 0)),
            scratch_shapes=[pltpu.VMEM((tb, 1, 1), jnp.float32)],
        ),
        compiler_params=pltpu.CompilerParams(
            dimension_semantics=("parallel", "parallel", "arbitrary"),
            vmem_limit_bytes=vmem_limit,
        ),
    )(a)

    # Combine the per-partition partial sums (P == 1 or 2).
    return parts.sum(axis=0)


if __name__ == "__main__":
    # 1) Small shape consistent with the module's [-1, -1, -1] f32 signature.
    a1 = jax.random.normal(jax.random.PRNGKey(0), (2, 16, 32), dtype=jnp.float32)
    out1 = jax.block_until_ready(reduce_sum_dims_1_2_keepdim(a1))
    ref1 = jnp.sum(a1, axis=(1, 2), keepdims=True)
    assert out1.shape == (2, 1, 1), out1.shape
    assert jnp.allclose(out1, ref1, rtol=1e-5, atol=1e-5), (out1, ref1)

    # 2) Ragged, non-tile-multiple dims, single-step path (no pad, no copy).
    a2 = jax.random.normal(jax.random.PRNGKey(1), (3, 260, 300), dtype=jnp.float32)
    out2 = jax.block_until_ready(reduce_sum_dims_1_2_keepdim(a2))
    ref2 = jnp.sum(a2, axis=(1, 2), keepdims=True)
    assert out2.shape == (3, 1, 1), out2.shape
    assert jnp.allclose(out2, ref2, rtol=1e-4, atol=1e-3), (out2, ref2)

    # 3) B == 1 with a large row: multi-step reduction, masked ragged M tail,
    #    and the 2-partition (both-TensorCore) reduction split.
    a3 = jax.random.normal(jax.random.PRNGKey(2), (1, 5000, 1024), dtype=jnp.float32)
    out3 = jax.block_until_ready(reduce_sum_dims_1_2_keepdim(a3))
    ref3 = jnp.sum(a3, axis=(1, 2), keepdims=True)
    assert out3.shape == (1, 1, 1), out3.shape
    # Loose atol: f32 summation-order differences over ~5M elements.
    assert jnp.allclose(out3, ref3, rtol=1e-4, atol=0.5), (out3, ref3)

    # 4) Many small rows: multiple batch blocks with a partial batch tail.
    a4 = jax.random.normal(jax.random.PRNGKey(3), (300, 8, 128), dtype=jnp.float32)
    out4 = jax.block_until_ready(reduce_sum_dims_1_2_keepdim(a4))
    ref4 = jnp.sum(a4, axis=(1, 2), keepdims=True)
    assert out4.shape == (300, 1, 1), out4.shape
    assert jnp.allclose(out4, ref4, rtol=1e-4, atol=1e-3), (out4, ref4)

    print("KERNEL_OK")
</pallas_src>

<mosaic_0001>
module attributes {stable_mosaic.version = 11 : i64} {
  func.func @kernel(%arg0: i32, %arg1: i32, %arg2: i32, %arg3: memref<2x16x32xf32, #tpu.memory_space<vmem>>, %arg4: memref<1x2x1x1xf32, #tpu.memory_space<vmem>>, %arg5: memref<2x1x1xf32, #tpu.memory_space<vmem>>) attributes {dimension_semantics = [#tpu.dimension_semantics<parallel>, #tpu.dimension_semantics<parallel>, #tpu.dimension_semantics<arbitrary>], iteration_bounds = array<i64: 1, 1, 1>, scalar_prefetch = 0 : i64, scratch_operands = 1 : i64, tpu.core_type = #tpu.core_type<tc>, window_params = [{transform_indices = @transform_0, window_bounds = array<i64: 2, 16, 32>}, {transform_indices = @transform_1, window_bounds = array<i64: 1, 2, 1, 1>}]} {
    %c0_i32 = arith.constant 0 : i32
    %0 = arith.cmpi eq, %arg2, %c0_i32 : i32
    %1 = arith.extui %0 : i1 to i32
    %c0_i32_0 = arith.constant 0 : i32
    %2 = arith.cmpi ne, %1, %c0_i32_0 : i32
    scf.if %2 {
      %cst_12 = arith.constant 0.000000e+00 : f32
      %14 = vector.broadcast %cst_12 : f32 to vector<2x1x1xf32>
      %c0_13 = arith.constant 0 : index
      %c0_14 = arith.constant 0 : index
      %c0_15 = arith.constant 0 : index
      %15 = vector.load %arg5[%c0_13, %c0_14, %c0_15] : memref<2x1x1xf32, #tpu.memory_space<vmem>>, vector<2x1x1xf32>
      tpu.vector_store %arg5[%c0_13, %c0_14, %c0_15], %14 {strides = array<i32>} : memref<2x1x1xf32, #tpu.memory_space<vmem>>, vector<2x1x1xf32>,
    } else {
    }
    %c0 = arith.constant 0 : index
    %c0_1 = arith.constant 0 : index
    %c0_2 = arith.constant 0 : index
    %3 = vector.load %arg3[%c0, %c0_1, %c0_2] : memref<2x16x32xf32, #tpu.memory_space<vmem>>, vector<2x16x32xf32>
    %cst = arith.constant dense<0.000000e+00> : vector<2x32xf32>
    %4 = vector.multi_reduction <add>, %3, %cst [1] : vector<2x16x32xf32> to vector<2x32xf32>
    %5 = vector.shape_cast %4 : vector<2x32xf32> to vector<2x1x32xf32>
    %c0_3 = arith.constant 0 : index
    %c0_4 = arith.constant 0 : index
    %c0_5 = arith.constant 0 : index
    %6 = vector.load %arg5[%c0_3, %c0_4, %c0_5] : memref<2x1x1xf32, #tpu.memory_space<vmem>>, vector<2x1x1xf32>
    %cst_6 = arith.constant dense<0.000000e+00> : vector<2x1xf32>
    %7 = vector.multi_reduction <add>, %5, %cst_6 [2] : vector<2x1x32xf32> to vector<2x1xf32>
    %8 = vector.shape_cast %7 : vector<2x1xf32> to vector<2x1x1xf32>
    %9 = arith.addf %6, %8 : vector<2x1x1xf32>
    %c0_7 = arith.constant 0 : index
    %c0_8 = arith.constant 0 : index
    %c0_9 = arith.constant 0 : index
    %10 = vector.load %arg5[%c0_7, %c0_8, %c0_9] : memref<2x1x1xf32, #tpu.memory_space<vmem>>, vector<2x1x1xf32>
    tpu.vector_store %arg5[%c0_7, %c0_8, %c0_9], %9 {strides = array<i32>} : memref<2x1x1xf32, #tpu.memory_space<vmem>>, vector<2x1x1xf32>,
    %c0_i32_10 = arith.constant 0 : i32
    %11 = arith.cmpi eq, %arg2, %c0_i32_10 : i32
    %12 = arith.extui %11 : i1 to i32
    %c0_i32_11 = arith.constant 0 : i32
    %13 = arith.cmpi ne, %12, %c0_i32_11 : i32
    scf.if %13 {
      %c0_12 = arith.constant 0 : index
      %c0_13 = arith.constant 0 : index
      %c0_14 = arith.constant 0 : index
      %14 = vector.load %arg5[%c0_12, %c0_13, %c0_14] : memref<2x1x1xf32, #tpu.memory_space<vmem>>, vector<2x1x1xf32>
      %c0_15 = arith.constant 0 : index
      %c0_16 = arith.constant 0 : index
      %c0_17 = arith.constant 0 : index
      %c0_18 = arith.constant 0 : index
      %15 = vector.load %arg4[%c0_15, %c0_16, %c0_17, %c0_18] : memref<1x2x1x1xf32, #tpu.memory_space<vmem>>, vector<1x2x1x1xf32>
      %16 = vector.shape_cast %15 : vector<1x2x1x1xf32> to vector<2x1x1xf32>
      %17 = vector.shape_cast %14 : vector<2x1x1xf32> to vector<1x2x1x1xf32>
      tpu.vector_store %arg4[%c0_15, %c0_16, %c0_17, %c0_18], %17 {strides = array<i32>} : memref<1x2x1x1xf32, #tpu.memory_space<vmem>>, vector<1x2x1x1xf32>,
    } else {
    }
    return
  }
  func.func @transform_0(%arg0: i32, %arg1: i32, %arg2: i32) -> (i32, i32, i32) {
    %c1_i32 = arith.constant 1 : i32
    %0 = arith.muli %arg0, %c1_i32 : i32
    %1 = arith.addi %0, %arg2 : i32
    %c0_i32 = arith.constant 0 : i32
    %2 = arith.minsi %1, %c0_i32 : i32
    %c0_i32_0 = arith.constant 0 : i32
    %c0_i32_1 = arith.constant 0 : i32
    return %arg1, %2, %c0_i32_0 : i32, i32, i32
  }
  func.func @transform_1(%arg0: i32, %arg1: i32, %arg2: i32) -> (i32, i32, i32, i32) {
    %c0_i32 = arith.constant 0 : i32
    %c0_i32_0 = arith.constant 0 : i32
    %c0_i32_1 = arith.constant 0 : i32
    return %arg0, %arg1, %c0_i32, %c0_i32_0 : i32, i32, i32, i32
  }
}

</mosaic_0001>

<llo_original>
// kernel: tpu_custom_call.1
$region0: #{tpu_custom_call.1}
  #allocation0 [shape = 'u32[]', space=smem, size = 0x4, offset = 0x4, fixed_abs, tag = 'smem constant byte address 0x4 - core index']
  #allocation1 [shape = 'u32[72,128]{1,0:T(1,128)}', space=vmem, size = 0x9000, scoped, tag = 'internal scratch']
  #allocation2 [shape = 'f32[2,1,1]{2,1,0:T(1,128)}', space=vmem, size = 0x400, scoped, tag = 'scratch operand']
  %s0 = inlined_call_operand.hbm [shape: f32[2,16,32], index: 0, kind: input, shape index: {}]
  %s1 = inlined_call_operand.vmem [shape: f32[1,2,1,1], index: 1, kind: output, shape index: {}]
  %s2 = sld [smem:[#allocation0]]
  $region26: #{tpu_custom_call.1} parent=0
    _
  %s4 = ssub.s32 1, %s2
  %s5 = scalar_select 0, %s4, %s2
  $region1: #{tpu_custom_call.1} parent=0
    #allocation3 [shape = 'u8[16384]{0}', space=vmem, size = 0x4000, scoped, tag = 'input window, operand 0, single buffered']
    #allocation4 [shape = 's32[1]{0}', space=sflag, size = 0x4, scoped, tag = 'scoped memory for tpu_custom_call.1']
    %6 = vsyncpa [#allocation4], 0
    // Predicated region
    $region2: #{tpu_custom_call.1} parent=1 // pred_check
      _
    $region3: #{tpu_custom_call.1} parent=1 // pred_check_branch
      %8 = sbr.rel (0) target = $region5
    $region4: #{tpu_custom_call.1} parent=1 // pred_region
      %s9 = sadd.s32 0, 0
      %p10 = scmp.lt.s32.totalorder %s9, 0
      %s11 = scalar_select %p10, %s9, 0
      %s12 = smul.u32 2, %s11
      %14 = vsyncadd [#allocation4], 0
      %s15 = smul.addr %s12, 8
      %s16 = scalar_lea.hbm %s0, %s15
      %s17 = sshll.u32 %s16, 4
      %s18 = int_to_ptr.hbm [resolvable:$true] %s17
      %s19 = sshll.u32 [#allocation3], 4
      %s20 = int_to_ptr.vmem [resolvable:$true] %s19
      %25 = dma.hbm_to_vmem [thread:$0]  %s18, 512, %s20, [#allocation4], 128, 128, 8
    $region5: #{tpu_custom_call.1} parent=1 // pred_fallthru
      _
    // Predicated region
    $region6: #{tpu_custom_call.1} parent=1 // pred_check
      _
    $region7: #{tpu_custom_call.1} parent=1 // pred_check_branch
      %27 = sbr.rel (0) target = $region9
    $region8: #{tpu_custom_call.1} parent=1 // pred_region
      %29 = dma.done [#allocation4], 512
    $region9: #{tpu_custom_call.1} parent=1 // pred_fallthru
      _
    %s30 = sadd.s32 0, 0
    %p31 = scmp.lt.s32.totalorder %s30, 0
    %s32 = scalar_select %p31, %s30, 0
    %s33 = smul.u32 2, %s32
    %p34 = scmp.eq.s32.totalorder 0, 0
    // Predicated region
    $region10: #{tpu_custom_call.1} parent=1 // pred_check
      %p35 = pneg %p34
    $region11: #{tpu_custom_call.1} parent=1 // pred_check_branch
      %37 = sbr.rel (%p35) target = $region13
    $region12: #{tpu_custom_call.1} parent=1 // pred_region
      %vm38 = vcmask 0
      %39 = vst.msk [vmem:[#allocation2] sm:$0x1] %vm38, 0.0
      %40 = vst.msk [vmem:[#allocation2 + $0x1] sm:$0x1] %vm38, 0.0
    $region13: #{tpu_custom_call.1} parent=1 // pred_fallthru
      _
    %v41 = vld [vmem:[#allocation3] sm:$0xff]
    %v42 = vld [vmem:[#allocation3 + $0x8] sm:$0xff]
    %v43 = vld [vmem:[#allocation3 + $0x10] sm:$0xff]
    %v44 = vld [vmem:[#allocation3 + $0x18] sm:$0xff]
    %vm45 = vcmask 261120
    %v46 = vsel %vm45, %v41, 0.0
    %v47 = vsel %vm45, %v42, 0.0
    %v48 = vadd.f32 %v46, %v47
    %v49 = vrot.slane %v48, 4
    %v50 = vadd.f32 %v48, %v49
    %v51 = vrot.slane %v50, 2
    %v52 = vadd.f32 %v50, %v51
    %v53 = vrot.slane %v52, 1
    %v54 = vadd.f32 %v52, %v53
    %v55 = vsel %vm45, %v43, 0.0
    %v56 = vsel %vm45, %v44, 0.0
    %v57 = vadd.f32 %v55, %v56
    %v58 = vrot.slane %v57, 4
    %v59 = vadd.f32 %v57, %v58
    %v60 = vrot.slane %v59, 2
    %v61 = vadd.f32 %v59, %v60
    %v62 = vrot.slane %v61, 1
    %v63 = vadd.f32 %v61, %v62
    %v64 = vld [vmem:[#allocation2] sm:$0x1]
    %v65 = vld [vmem:[#allocation2 + $0x1] sm:$0x1]
    %v66 = vsel %vm45, %v54, 0.0
    %67 = vadd.xlane.f32.xlu0 %v66
    %v68 = vpop.xlane.xlu0 %67
    %v69 = vsel %vm45, %v63, 0.0
    %70 = vadd.xlane.f32.xlu0 %v69
    %v71 = vpop.xlane.xlu0 %70
    %v72 = vadd.f32 %v64, %v68
    %v73 = vadd.f32 %v65, %v71
    %vm74 = vcmask 0
    %75 = vst.msk [vmem:[#allocation2] sm:$0x1] %vm74, %v72
    %76 = vst.msk [vmem:[#allocation2 + $0x1] sm:$0x1] %vm74, %v73
    // Predicated region
    $region14: #{tpu_custom_call.1} parent=1 // pred_check
      %p77 = pneg %p34
    $region15: #{tpu_custom_call.1} parent=1 // pred_check_branch
      %79 = sbr.rel (%p77) target = $region17
    $region16: #{tpu_custom_call.1} parent=1 // pred_region
      %v80 = vld [vmem:[#allocation2] sm:$0x1]
      %v81 = vld [vmem:[#allocation2 + $0x1] sm:$0x1]
      %82 = vst.msk [vmem:[%s1] sm:$0x1] %vm74, %v80
      %83 = vst.msk [vmem:[%s1 + $0x1] sm:$0x1] %vm74, %v81
    $region17: #{tpu_custom_call.1} parent=1 // pred_fallthru
      _
    // Predicated region
    $region18: #{tpu_custom_call.1} parent=1 // pred_check
      _
    $region19: #{tpu_custom_call.1} parent=1 // pred_check_branch
      %85 = sbr.rel (0) target = $region21
    $region20: #{tpu_custom_call.1} parent=1 // pred_region
      _
    $region21: #{tpu_custom_call.1} parent=1 // pred_fallthru
      _
    // Predicated region
    $region22: #{tpu_custom_call.1} parent=1 // pred_check
      _
    $region23: #{tpu_custom_call.1} parent=1 // pred_check_branch
      %87 = sbr.rel (0) target = $region25
    $region24: #{tpu_custom_call.1} parent=1 // pred_region
      _
    $region25: #{tpu_custom_call.1} parent=1 // pred_fallthru
      _
    %88 = vsyncpa [#allocation4], 1

</llo_original>
